<compile_context>
chip_gen: v6e
topology: v6e:2x2x1
jax: 0.10.0
libtpu: 0.0.40
codegen_flags: <defaults>
</compile_context>

<pallas_src>
import functools

import jax
import jax.numpy as jnp
from jax.experimental import pallas as pl
from jax.experimental.pallas import tpu as pltpu


def _norm_kernel(x_ref, alpha_ref, bias_ref, o_ref, *, eps, d_model):
    x = x_ref[...].astype(jnp.float32)          # (tile_rows, d_model)
    alpha = alpha_ref[...].astype(jnp.float32)  # (1, d_model)
    bias = bias_ref[...].astype(jnp.float32)    # (1, d_model)

    # Two-pass mean / unbiased variance (numerically safer than the fused
    # sum / sum-of-squares form for inputs with large means).
    mean = jnp.mean(x, axis=-1, keepdims=True)                     # (tile_rows, 1)
    centered = x - mean
    var_unbiased = jnp.sum(centered * centered, axis=-1, keepdims=True) / (d_model - 1)
    std = jnp.sqrt(var_unbiased)

    # Exact reciprocal on the narrow (tile_rows, 1) column -> EUP slot, then a
    # cheap VPU multiply instead of a full-width divide per lane.
    inv = pl.reciprocal(std + eps, approx=False)
    out = alpha * (centered * inv) + bias
    o_ref[...] = out.astype(o_ref.dtype)


def _choose_tile_rows(rows, d_model, dtype):
    """Pick a sublane-aligned rows tile that saturates HBM without busting VMEM."""
    itemsize = jnp.dtype(dtype).itemsize
    sublane = {4: 8, 2: 16, 1: 32}.get(itemsize, 8)

    def footprint(t):
        io_block = t * d_model * itemsize
        f32_tmp = 3 * t * d_model * 4        # f32 upcast / centered / out temporaries
        return 2 * 2 * io_block + f32_tmp    # double-buffered input + output

    # ~4 MiB block target; past ~512-1024 rows the kernel is HBM-bound anyway.
    target_block_bytes = 4 * 1024 * 1024
    tile = max(sublane, (target_block_bytes // max(1, d_model * itemsize)))
    tile = (tile // sublane) * sublane
    tile = min(tile, 1024)

    # Keep total pipelined VMEM comfortably under v7x's 64 MiB physical VMEM.
    budget = 40 * 1024 * 1024
    while tile > sublane and footprint(tile) > budget:
        tile -= sublane

    # Don't over-pad tiny inputs.
    rows_rounded = ((rows + sublane - 1) // sublane) * sublane
    tile = min(tile, max(sublane, rows_rounded))
    return tile


def norm_forward(x, alpha, bias, eps=1e-6, tile_rows=None):
    """x: (..., d_model). Returns the same shape/dtype as x."""
    orig_shape = x.shape
    d_model = orig_shape[-1]
    assert d_model >= 2, "unbiased std (divide by N-1) requires d_model >= 2"

    x2 = x.reshape(-1, d_model)
    rows = x2.shape[0]
    itemsize = jnp.dtype(x.dtype).itemsize

    if tile_rows is None:
        tile_rows = _choose_tile_rows(rows, d_model, x.dtype)

    # Pad rows so the grid covers everything; padded rows are sliced off below.
    n_blocks = pl.cdiv(rows, tile_rows)
    rows_padded = n_blocks * tile_rows
    if rows_padded != rows:
        x2 = jnp.pad(x2, ((0, rows_padded - rows), (0, 0)))

    alpha2 = alpha.reshape(1, d_model)
    bias2 = bias.reshape(1, d_model)

    # Explicit VMEM budget: double-buffered in+out blocks + f32 temporaries,
    # with a little headroom, clamped to something every generation tolerates.
    footprint = 2 * 2 * tile_rows * d_model * itemsize + 3 * tile_rows * d_model * 4
    vmem_limit = int(min(96 * 2**20, max(32 * 2**20, footprint * 5 // 4)))

    cost = pl.CostEstimate(
        flops=6 * rows_padded * d_model,
        transcendentals=2 * rows_padded,  # sqrt + reciprocal per row
        bytes_accessed=2 * rows_padded * d_model * itemsize
        + 2 * d_model * jnp.dtype(alpha.dtype).itemsize,
    )

    kernel = functools.partial(_norm_kernel, eps=eps, d_model=d_model)

    out = pl.pallas_call(
        kernel,
        out_shape=jax.ShapeDtypeStruct((rows_padded, d_model), x.dtype),
        grid_spec=pltpu.PrefetchScalarGridSpec(
            num_scalar_prefetch=0,
            grid=(n_blocks,),
            in_specs=[
                pl.BlockSpec((tile_rows, d_model), lambda i: (i, 0)),
                pl.BlockSpec((1, d_model), lambda i: (0, 0)),
                pl.BlockSpec((1, d_model), lambda i: (0, 0)),
            ],
            out_specs=pl.BlockSpec((tile_rows, d_model), lambda i: (i, 0)),
        ),
        compiler_params=pltpu.CompilerParams(
            dimension_semantics=("parallel",),
            vmem_limit_bytes=vmem_limit,
        ),
        cost_estimate=cost,
    )(x2, alpha2, bias2)

    if rows_padded != rows:
        out = out[:rows]
    return out.reshape(orig_shape)


if __name__ == "__main__":
    key = jax.random.PRNGKey(0)
    batch, seq, d_model = 2, 8, 32  # small demo; d_model < 128 is slow but correct

    x = jax.random.normal(key, (batch, seq, d_model), dtype=jnp.float32)

    # Deterministic parameter init matching nn.Parameter(torch.ones/zeros(d_model))
    alpha = jnp.ones((d_model,), dtype=jnp.float32)
    bias = jnp.zeros((d_model,), dtype=jnp.float32)

    out = norm_forward(x, alpha, bias, eps=1e-6)
    out = jax.block_until_ready(out)

    # Reference check in plain JAX (unbiased std, eps added to std)
    mean = jnp.mean(x, axis=-1, keepdims=True)
    std = jnp.sqrt(jnp.sum((x - mean) ** 2, axis=-1, keepdims=True) / (d_model - 1))
    ref = alpha * (x - mean) / (std + 1e-6) + bias
    assert jnp.allclose(out, ref, atol=1e-5, rtol=1e-5), "mismatch vs reference"

    # Also exercise the ragged-rows (pad-and-slice) path with a bigger tile.
    x_big = jax.random.normal(jax.random.PRNGKey(1), (3, 7, d_model), dtype=jnp.float32)
    out_big = jax.block_until_ready(norm_forward(x_big, alpha, bias, eps=1e-6, tile_rows=16))
    mean_b = jnp.mean(x_big, axis=-1, keepdims=True)
    std_b = jnp.sqrt(jnp.sum((x_big - mean_b) ** 2, axis=-1, keepdims=True) / (d_model - 1))
    ref_b = alpha * (x_big - mean_b) / (std_b + 1e-6) + bias
    assert jnp.allclose(out_big, ref_b, atol=1e-5, rtol=1e-5), "ragged path mismatch"

    print("KERNEL_OK")
</pallas_src>

<mosaic_0001>
module attributes {stable_mosaic.version = 11 : i64} {
  func.func @_norm_kernel(%arg0: i32, %arg1: memref<16x32xf32, #tpu.memory_space<vmem>>, %arg2: memref<1x32xf32, #tpu.memory_space<vmem>>, %arg3: memref<1x32xf32, #tpu.memory_space<vmem>>, %arg4: memref<16x32xf32, #tpu.memory_space<vmem>>) attributes {dimension_semantics = [#tpu.dimension_semantics<parallel>], iteration_bounds = array<i64: 1>, scalar_prefetch = 0 : i64, scratch_operands = 0 : i64, tpu.core_type = #tpu.core_type<tc>, window_params = [{transform_indices = @transform_0, window_bounds = array<i64: 16, 32>}, {pipeline_mode = #tpu.pipeline_mode<synchronous>, transform_indices = @transform_1, window_bounds = array<i64: 1, 32>}, {pipeline_mode = #tpu.pipeline_mode<synchronous>, transform_indices = @transform_2, window_bounds = array<i64: 1, 32>}, {transform_indices = @transform_3, window_bounds = array<i64: 16, 32>}]} {
    %c0 = arith.constant 0 : index
    %c0_0 = arith.constant 0 : index
    %0 = vector.load %arg1[%c0, %c0_0] : memref<16x32xf32, #tpu.memory_space<vmem>>, vector<16x32xf32>
    %c0_1 = arith.constant 0 : index
    %c0_2 = arith.constant 0 : index
    %1 = vector.load %arg2[%c0_1, %c0_2] : memref<1x32xf32, #tpu.memory_space<vmem>>, vector<1x32xf32>
    %c0_3 = arith.constant 0 : index
    %c0_4 = arith.constant 0 : index
    %2 = vector.load %arg3[%c0_3, %c0_4] : memref<1x32xf32, #tpu.memory_space<vmem>>, vector<1x32xf32>
    %cst = arith.constant dense<0.000000e+00> : vector<16xf32>
    %3 = vector.multi_reduction <add>, %0, %cst [1] : vector<16x32xf32> to vector<16xf32>
    %4 = vector.shape_cast %3 : vector<16xf32> to vector<16x1xf32>
    %cst_5 = arith.constant 3.200000e+01 : f32
    %5 = vector.broadcast %cst_5 : f32 to vector<16x1xf32>
    %6 = arith.divf %4, %5 : vector<16x1xf32>
    %7 = vector.broadcast %6 : vector<16x1xf32> to vector<16x32xf32>
    %8 = arith.subf %0, %7 : vector<16x32xf32>
    %9 = arith.mulf %8, %8 : vector<16x32xf32>
    %cst_6 = arith.constant dense<0.000000e+00> : vector<16xf32>
    %10 = vector.multi_reduction <add>, %9, %cst_6 [1] : vector<16x32xf32> to vector<16xf32>
    %11 = vector.shape_cast %10 : vector<16xf32> to vector<16x1xf32>
    %cst_7 = arith.constant 3.100000e+01 : f32
    %12 = vector.broadcast %cst_7 : f32 to vector<16x1xf32>
    %13 = arith.divf %11, %12 : vector<16x1xf32>
    %14 = math.sqrt %13 : vector<16x1xf32>
    %cst_8 = arith.constant 9.99999997E-7 : f32
    %15 = vector.broadcast %cst_8 : f32 to vector<16x1xf32>
    %16 = arith.addf %14, %15 : vector<16x1xf32>
    %17 = tpu.reciprocal %16 : vector<16x1xf32> -> vector<16x1xf32>
    %18 = vector.broadcast %17 : vector<16x1xf32> to vector<16x32xf32>
    %19 = arith.mulf %8, %18 : vector<16x32xf32>
    %20 = vector.broadcast %1 : vector<1x32xf32> to vector<16x32xf32>
    %21 = arith.mulf %20, %19 : vector<16x32xf32>
    %22 = vector.broadcast %2 : vector<1x32xf32> to vector<16x32xf32>
    %23 = arith.addf %21, %22 : vector<16x32xf32>
    %c0_9 = arith.constant 0 : index
    %c0_10 = arith.constant 0 : index
    %24 = vector.load %arg4[%c0_9, %c0_10] : memref<16x32xf32, #tpu.memory_space<vmem>>, vector<16x32xf32>
    tpu.vector_store %arg4[%c0_9, %c0_10], %23 {strides = array<i32>} : memref<16x32xf32, #tpu.memory_space<vmem>>, vector<16x32xf32>,
    return
  }
  func.func @transform_0(%arg0: i32) -> (i32, i32) {
    %c0_i32 = arith.constant 0 : i32
    %c0_i32_0 = arith.constant 0 : i32
    return %arg0, %c0_i32 : i32, i32
  }
  func.func @transform_1(%arg0: i32) -> (i32, i32) {
    %c0_i32 = arith.constant 0 : i32
    %c0_i32_0 = arith.constant 0 : i32
    %c0_i32_1 = arith.constant 0 : i32
    return %c0_i32, %c0_i32_0 : i32, i32
  }
  func.func @transform_2(%arg0: i32) -> (i32, i32) {
    %c0_i32 = arith.constant 0 : i32
    %c0_i32_0 = arith.constant 0 : i32
    %c0_i32_1 = arith.constant 0 : i32
    return %c0_i32, %c0_i32_0 : i32, i32
  }
  func.func @transform_3(%arg0: i32) -> (i32, i32) {
    %c0_i32 = arith.constant 0 : i32
    %c0_i32_0 = arith.constant 0 : i32
    return %arg0, %c0_i32 : i32, i32
  }
}

</mosaic_0001>

<llo_original>
// kernel: tpu_custom_call.1
$region0: #{tpu_custom_call.1}
  #allocation0 [shape = 'u32[]', space=smem, size = 0x4, offset = 0x4, fixed_abs, tag = 'smem constant byte address 0x4 - core index']
  #allocation1 [shape = 'u32[144,128]{1,0:T(1,128)}', space=vmem, size = 0x12000, scoped, tag = 'internal scratch']
  %s0 = inlined_call_operand.hbm [shape: f32[16,32], index: 0, kind: input, shape index: {}]
  %s1 = inlined_call_operand.vmem [shape: f32[1,32], index: 1, kind: input, shape index: {}]
  %s2 = inlined_call_operand.vmem [shape: f32[1,32], index: 2, kind: input, shape index: {}]
  %s3 = inlined_call_operand.hbm [shape: f32[16,32], index: 3, kind: output, shape index: {}]
  %s4 = sld [smem:[#allocation0]]
  $region26: #{tpu_custom_call.1} parent=0
    _
  %s6 = ssub.s32 1, %s4
  %s7 = scalar_select 0, %s6, %s4
  $region1: #{tpu_custom_call.1} parent=0
    #allocation2 [shape = 'u8[8192]{0}', space=vmem, size = 0x2000, scoped, tag = 'input window, operand 0, single buffered']
    #allocation3 [shape = 's32[1]{0}', space=sflag, size = 0x4, scoped, tag = 'scoped memory for tpu_custom_call.1']
    #allocation4 [shape = 's32[1]{0}', space=sflag, size = 0x4, scoped, tag = 'scoped memory for tpu_custom_call.1']
    #allocation5 [shape = 'u8[8192]{0}', space=vmem, size = 0x2000, scoped, tag = 'output window, operand 0, single buffered']
    %8 = vsyncpa [#allocation3], 0
    %9 = vsyncpa [#allocation4], 0
    // Predicated region
    $region2: #{tpu_custom_call.1} parent=1 // pred_check
      _
    $region3: #{tpu_custom_call.1} parent=1 // pred_check_branch
      %11 = sbr.rel (0) target = $region5
    $region4: #{tpu_custom_call.1} parent=1 // pred_region
      %s13 = ssub.s32 256, 256
      %14 = vsyncadd [#allocation3], %s13
      %s15 = sshll.u32 [#allocation2], 4
      %s16 = int_to_ptr.vmem [resolvable:$true] %s15
      %21 = dma.hbm_to_vmem [thread:$0]  %s0, 256, %s16, [#allocation3], 128, 128, 8
    $region5: #{tpu_custom_call.1} parent=1 // pred_fallthru
      _
    // Predicated region
    $region6: #{tpu_custom_call.1} parent=1 // pred_check
      _
    $region7: #{tpu_custom_call.1} parent=1 // pred_check_branch
      %23 = sbr.rel (0) target = $region9
    $region8: #{tpu_custom_call.1} parent=1 // pred_region
      _
    $region9: #{tpu_custom_call.1} parent=1 // pred_fallthru
      _
    // Predicated region
    $region10: #{tpu_custom_call.1} parent=1 // pred_check
      _
    $region11: #{tpu_custom_call.1} parent=1 // pred_check_branch
      %25 = sbr.rel (0) target = $region13
    $region12: #{tpu_custom_call.1} parent=1 // pred_region
      _
    $region13: #{tpu_custom_call.1} parent=1 // pred_fallthru
      _
    // Predicated region
    $region14: #{tpu_custom_call.1} parent=1 // pred_check
      _
    $region15: #{tpu_custom_call.1} parent=1 // pred_check_branch
      %27 = sbr.rel (0) target = $region17
    $region16: #{tpu_custom_call.1} parent=1 // pred_region
      %28 = dma.done [#allocation3], 256
    $region17: #{tpu_custom_call.1} parent=1 // pred_fallthru
      _
    %v29 = vld [vmem:[#allocation2] sm:$0xff]
    %v30 = vld [vmem:[#allocation2 + $0x8] sm:$0xff]
    %v31 = vld [vmem:[%s1] sm:$0x1]
    %v32 = vld [vmem:[%s2] sm:$0x1]
    %vm33 = vcmask 261120
    %v34 = vsel %vm33, %v29, 0.0
    %35 = vadd.xlane.f32.xlu0 %v34
    %v36 = vpop.xlane.xlu0 %35
    %v37 = vsel %vm33, %v30, 0.0
    %38 = vadd.xlane.f32.xlu0 %v37
    %v39 = vpop.xlane.xlu0 %38
    %v40 = vrcp.pop 32.0
    %v41 = vmul.f32 %v36, %v40
    %v42 = vmul.f32 %v39, %v40
    %v43 = vsub.f32 %v29, %v41
    %v44 = vsub.f32 %v30, %v42
    %v45 = vmul.f32 %v43, %v43
    %v46 = vmul.f32 %v44, %v44
    %v47 = vsel %vm33, %v45, 0.0
    %48 = vadd.xlane.f32.xlu0 %v47
    %v49 = vpop.xlane.xlu0 %48
    %v50 = vsel %vm33, %v46, 0.0
    %51 = vadd.xlane.f32.xlu0 %v50
    %v52 = vpop.xlane.xlu0 %51
    %v53 = vrcp.pop 31.0
    %v54 = vmul.f32 %v49, %v53
    %v55 = vmul.f32 %v52, %v53
    %v56 = vrsqrt.pop %v54
    %v57 = vmul.f32 %v54, %v56
    %vm58 = vcmp.eq.f32.partialorder %v54, inf
    %v59 = vsel %vm58, %v54, %v57
    %vm60 = vcmp.eq.f32.partialorder %v54, 0.0
    %v61 = vand.u32 %v54, 2147483648
    %v62 = vsel %vm60, %v61, %v59
    %v63 = vrsqrt.pop %v55
    %v64 = vmul.f32 %v55, %v63
    %vm65 = vcmp.eq.f32.partialorder %v55, inf
    %v66 = vsel %vm65, %v55, %v64
    %vm67 = vcmp.eq.f32.partialorder %v55, 0.0
    %v68 = vand.u32 %v55, 2147483648
    %v69 = vsel %vm67, %v68, %v66
    %v70 = vadd.f32 %v62, 1e-06
    %v71 = vadd.f32 %v69, 1e-06
    %v72 = vrcp.pop %v70
    %v73 = vrcp.pop %v71
    %v74 = vmul.f32 %v43, %v72
    %v75 = vmul.f32 %v44, %v73
    %v77 = vlaneseq
    %v78 = vshrl.u32 %v77, 7
    %v79 = vsub.s32 0, %v78
    %v80 = vrot.slane %v31, %v79
    %v82 = vmul.f32 %v80, %v74
    %v83 = vmul.f32 %v80, %v75
    %v85 = vlaneseq
    %v86 = vshrl.u32 %v85, 7
    %v87 = vsub.s32 0, %v86
    %v88 = vrot.slane %v32, %v87
    %v90 = vadd.f32 %v82, %v88
    %v91 = vadd.f32 %v83, %v88
    %92 = vst.msk [vmem:[#allocation5] sm:$0xff] %vm33, %v90
    %93 = vst.msk [vmem:[#allocation5 + $0x8] sm:$0xff] %vm33, %v91
    // Predicated region
    $region18: #{tpu_custom_call.1} parent=1 // pred_check
      _
    $region19: #{tpu_custom_call.1} parent=1 // pred_check_branch
      %95 = sbr.rel (0) target = $region21
    $region20: #{tpu_custom_call.1} parent=1 // pred_region
      %s97 = ssub.s32 256, 256
      %98 = vsyncadd [#allocation4], %s97
      %s99 = sshll.u32 [#allocation5], 4
      %s100 = int_to_ptr.vmem [resolvable:$true] %s99
      %105 = dma.vmem_to_hbm [thread:$0]  %s100, 256, %s3, [#allocation4], 128, 128, 8
    $region21: #{tpu_custom_call.1} parent=1 // pred_fallthru
      _
    // Predicated region
    $region22: #{tpu_custom_call.1} parent=1 // pred_check
      _
    $region23: #{tpu_custom_call.1} parent=1 // pred_check_branch
      %107 = sbr.rel (0) target = $region25
    $region24: #{tpu_custom_call.1} parent=1 // pred_region
      %108 = dma.done [#allocation4], 256
    $region25: #{tpu_custom_call.1} parent=1 // pred_fallthru
      _
    %109 = vsyncpa [#allocation3], 1
    %110 = vsyncpa [#allocation4], 1

</llo_original>
